<compile_context>
chip_gen: v7x
topology: tpu7x:2x2x1
jax: 0.10.0
libtpu: 0.0.40
codegen_flags: <defaults>
</compile_context>

<pallas_src>
import numbers
import numpy as np

import jax
import jax.numpy as jnp
from jax import lax
from jax.experimental import pallas as pl
from jax.experimental.pallas import tpu as pltpu


# ----------------------------------------------------------------------------
# geometry helpers (mirror of DSPP2d's forward math)
# ----------------------------------------------------------------------------

def _to_2d_tuples(param, level):
    """Mirror of DSPP2d._to_tuple_2d (validation trimmed)."""
    if isinstance(param, numbers.Real):
        return ((int(param), int(param)),) * level
    out = []
    for v in param:
        if isinstance(v, numbers.Real):
            out.append((int(v), int(v)))
        else:
            out.append((int(v[0]), int(v[1])))
    if len(out) != level:
        raise ValueError("param level must match output_size level")
    return tuple(out)


def _ceil_div(a, b):
    return -(-a // b)


def _round_up(a, b):
    return _ceil_div(a, b) * b


def _level_geometry(H, W, s, d):
    (s0, s1), (d0, d1) = s, d
    kh, kw = _ceil_div(H, s0), _ceil_div(W, s1)      # window size
    sh, sw = H // s0, W // s1                        # stride
    if sh == 0 or sw == 0:
        raise ValueError(
            f"output_size {s} must not exceed input spatial size ({H}, {W})")
    ph = _ceil_div((s0 - 1) * sh + d0 * (kh - 1) - H + 1, 2)
    pw = _ceil_div((s1 - 1) * sw + d1 * (kw - 1) - W + 1, 2)
    Hp, Wp = H + 2 * ph, W + 2 * pw
    # same output-size formula as torch max_pool2d / avg_pool2d (padding=0)
    oh = (Hp - d0 * (kh - 1) - 1) // sh + 1
    ow = (Wp - d1 * (kw - 1) - 1) // sw + 1
    return kh, kw, sh, sw, ph, pw, Hp, Wp, oh, ow


# ----------------------------------------------------------------------------
# selector construction (host side, numpy)
# ----------------------------------------------------------------------------

def _build_selector(H, W, HW_pad, geos, dils, pool, n_chunks, tcs, los, c_chunk):
    """Build the 0/1 gather matrix, shape (HW_pad, n_chunks * c_chunk).

    max: column (j*c_chunk + lo_l + u*G_l + g) one-hot selects the input pixel
         of tap (j*tc_l + u) of output window g of level l.  Taps past T_l
         duplicate tap 0 (max-neutral); taps landing in F.pad's zero region
         are all-zero columns, reproducing the pad value 0.
    avg: taps are pre-folded -- column (lo_l + g) has a 1 at every in-range
         pixel of window g (pixels inside one window are distinct, so entries
         stay exactly 0/1); the 1/(kh*kw) scale is applied post-matmul.
    Rows >= H*W (lane padding) stay all-zero, which is reduction-neutral.
    """
    S = np.zeros((HW_pad, n_chunks * c_chunk), np.float32)
    for lvl, (geo, d) in enumerate(zip(geos, dils)):
        kh, kw, sh, sw, ph, pw, _, _, oh, ow = geo
        dh, dw = d
        T, G = kh * kw, oh * ow
        lo, tc = los[lvl], tcs[lvl]

        def scatter(tap, col_base):
            i, jw = tap // kw, tap % kw
            for p in range(oh):
                h = p * sh + i * dh - ph              # un-padded row coordinate
                if not (0 <= h < H):
                    continue                          # pad region -> stays 0
                for q in range(ow):
                    w = q * sw + jw * dw - pw
                    if not (0 <= w < W):
                        continue
                    S[h * W + w, col_base + p * ow + q] = 1.0

        if pool == 'avg':
            for t in range(T):
                scatter(t, lo)                        # all taps fold into col lo+g
        else:
            for j in range(n_chunks):
                for u in range(tc):
                    t = j * tc + u
                    te = t if t < T else 0            # duplicate tap 0: max-neutral
                    scatter(te, j * c_chunk + lo + u * G)
    return S


# ----------------------------------------------------------------------------
# kernel
# ----------------------------------------------------------------------------

def _make_kernel(levels, pool, n_chunks):
    """levels: static tuple of (lo, tc, G, c, Gp, inv) per pyramid level."""
    is_max = pool == 'max'
    op = jnp.maximum if is_max else (lambda a, b: a + b)
    init_val = -jnp.inf if is_max else 0.0

    def kernel(x_ref, sel_ref, o_ref, acc_ref):
        j = pl.program_id(1)                          # selector-chunk axis
        # One MXU gather for every level / tap / output position in this chunk.
        y = jnp.dot(x_ref[...].astype(sel_ref.dtype), sel_ref[...],
                    preferred_element_type=jnp.float32)

        # In-chunk tap reduction per level: halving lane-fold on the VPU,
        # arbitrary (odd) tap counts handled via a g-wide carry group.
        reduced = []
        for (lo, tc, g, c, gp, inv) in levels:
            yb = y[:, lo: lo + tc * g]
            carry = None
            t = tc
            while t > 1:
                if t & 1:
                    tail = yb[:, (t - 1) * g: t * g]
                    carry = tail if carry is None else op(carry, tail)
                    t -= 1
                half = t // 2
                yb = op(yb[:, : half * g], yb[:, half * g: t * g])
                t = half
            if carry is not None:
                yb = op(yb, carry)
            reduced.append(yb)                        # (tile, g)

        @pl.when(j == 0)
        def _():
            acc_ref[...] = jnp.full(acc_ref.shape, init_val, jnp.float32)

        for (lo, tc, g, c, gp, inv), red in zip(levels, reduced):
            acc_ref[:, c: c + g] = op(acc_ref[:, c: c + g], red)

        @pl.when(j == n_chunks - 1)
        def _():
            # one lane-dense (128-aligned) store per level slot
            for (lo, tc, g, c, gp, inv) in levels:
                slab = acc_ref[:, c: c + gp]
                if not is_max:
                    slab = slab * inv                 # avg: divide by kh*kw
                o_ref[:, c: c + gp] = slab.astype(o_ref.dtype)

    return kernel


# ----------------------------------------------------------------------------
# public wrapper
# ----------------------------------------------------------------------------

def dspp2d(x, output_size=(4, 2, 1), dilation=1, pool='max',
           block_nc=None, max_chunk_cols=None):
    """Dilated SPP forward. x: (N, C, H, W) -> (N, sum_l C*oh_l*ow_l)."""
    if pool not in ('max', 'avg'):
        raise ValueError("only 'max' or 'avg' pooling supported")
    N, C, H, W = x.shape
    level = 1 if isinstance(output_size, numbers.Real) else len(output_size)
    sizes = _to_2d_tuples(output_size, level)
    dils = _to_2d_tuples(dilation, level)

    NC, HW = N * C, H * W
    HW_pad = _round_up(HW, 128)                      # lane-dense input / MXU K

    geos = [_level_geometry(H, W, s, d) for s, d in zip(sizes, dils)]
    Ts = [g[0] * g[1] for g in geos]                 # taps per window
    Gs = [g[8] * g[9] for g in geos]                 # output positions

    x_item = jnp.dtype(x.dtype).itemsize
    # bf16 inputs take the MXU fast path; f32 stays f32 (never downcast x).
    sel_dtype = jnp.bfloat16 if x.dtype == jnp.bfloat16 else jnp.float32
    sel_item = jnp.dtype(sel_dtype).itemsize
    granule = 8 if x_item >= 4 else (16 if x_item == 2 else 32)

    # ---- selector column chunking ("arbitrary" reduction grid axis) --------
    # Cap the per-step selector slab so VMEM stays bounded regardless of H*W.
    if max_chunk_cols is None:
        sel_budget = 8 << 20                         # ~2 x 4 MiB pipeline buffers
        max_chunk_cols = max(
            128, (sel_budget // (2 * HW_pad * sel_item)) // 128 * 128)
    eff_T = Ts if pool == 'max' else [1] * level     # avg: taps pre-folded

    def _chunk_cols(nc_):
        return sum(_ceil_div(t, nc_) * g for t, g in zip(eff_T, Gs))

    n_chunks = 1
    while _chunk_cols(n_chunks) > max_chunk_cols and n_chunks < max(eff_T):
        n_chunks += 1
    tcs = [_ceil_div(t, n_chunks) for t in eff_T]    # taps per chunk per level
    los, off = [], 0
    for tc, g in zip(tcs, Gs):
        los.append(off)
        off += tc * g
    C_chunk = _round_up(max(off, 1), 128)            # 128-multiple block width

    # ---- 128-aligned per-level output slots (lane-dense writeback) ---------
    slots, coff, out_slices = [], 0, []
    for g in Gs:
        gp = _round_up(g, 128)
        slots.append((coff, gp))
        out_slices.append((coff, g))
        coff += gp
    D_pad = coff

    levels = tuple((los[l], tcs[l], Gs[l], slots[l][0], slots[l][1],
                    1.0 / float(Ts[l])) for l in range(level))

    sel_np = _build_selector(H, W, HW_pad, geos, dils, pool,
                             n_chunks, tcs, los, C_chunk)
    sel = jnp.asarray(sel_np, dtype=sel_dtype)

    # ---- NC tiling ("parallel" grid axis) -----------------------------------
    if block_nc is None:
        block_nc = 256                               # fills MXU M on v6e/v7x
        try:
            kind = jax.devices()[0].device_kind.lower()
            if 'v5 lite' in kind or 'v5e' in kind or 'v4' in kind:
                block_nc = 128                       # 128x128 MXU parts
        except Exception:
            pass
    block_nc = max(granule, (int(block_nc) // granule) * granule)
    block_nc = min(block_nc, _round_up(NC, granule))
    # VMEM clamp: keep the double-buffered x tile under ~12 MiB
    max_rows = (12 << 20) // (2 * HW_pad * x_item)
    block_nc = min(block_nc, max(granule, (max_rows // granule) * granule))
    # give the "parallel" axis >= 2 steps when possible (v7x: 2 TensorCores)
    if _ceil_div(NC, block_nc) < 2 and block_nc > granule:
        block_nc = max(granule, ((block_nc // 2) // granule) * granule)
    NC_pad = _round_up(NC, block_nc)

    x_flat = x.reshape(NC, HW)                       # lane-dense input slab
    if NC_pad != NC or HW_pad != HW:
        x_flat = jnp.pad(x_flat, ((0, NC_pad - NC), (0, HW_pad - HW)))

    kernel = _make_kernel(levels, pool, n_chunks)
    n_tiles = NC_pad // block_nc

    est_vmem = (2 * block_nc * HW_pad * x_item       # x tile, double-buffered
                + 2 * HW_pad * C_chunk * sel_item    # selector chunk, x2
                + block_nc * C_chunk * 4             # matmul result
                + block_nc * D_pad * 4               # accumulator scratch
                + 2 * block_nc * D_pad * x_item)     # output tile, x2
    vmem_limit = int(min(max(2 * est_vmem, 32 << 20), 56 << 20))

    cost = pl.CostEstimate(
        flops=int(2 * NC_pad * HW_pad * n_chunks * C_chunk),
        transcendentals=0,
        bytes_accessed=int(NC_pad * HW_pad * x_item
                           + n_tiles * sel.size * sel_item
                           + NC_pad * D_pad * x_item))

    out = pl.pallas_call(
        kernel,
        out_shape=jax.ShapeDtypeStruct((NC_pad, D_pad), x.dtype),
        grid=(n_tiles, n_chunks),
        in_specs=[
            # x tile: constant across the chunk axis -> fetched once per tile
            pl.BlockSpec((block_nc, HW_pad), lambda i, j: (i, 0)),
            # selector: streamed chunk-by-chunk along the reduction axis
            pl.BlockSpec((HW_pad, C_chunk), lambda i, j: (0, j)),
        ],
        out_specs=pl.BlockSpec((block_nc, D_pad), lambda i, j: (i, 0)),
        scratch_shapes=[pltpu.VMEM((block_nc, D_pad), jnp.float32)],
        compiler_params=pltpu.CompilerParams(
            dimension_semantics=("parallel", "arbitrary"),
            vmem_limit_bytes=vmem_limit),
        cost_estimate=cost,
    )(x_flat, sel)

    # strip padding and reorder to PyTorch's concat-of-levels (N, C*oh*ow)
    out = out[:NC].reshape(N, C, D_pad)
    vecs = [out[:, :, c:c + g].reshape(N, C * g) for (c, g) in out_slices]
    return jnp.concatenate(vecs, axis=1)

# TODO(synk): for very large H*W a direct VPU max-reduction variant (H on
# sublanes / W on lanes, strided jnp.maximum) would beat the one-hot MXU
# gather; not implemented here.


# ----------------------------------------------------------------------------
# pure-JAX reference (mirrors the PyTorch forward)
# ----------------------------------------------------------------------------

def dspp2d_reference(x, output_size=(4, 2, 1), dilation=1, pool='max'):
    N, C, H, W = x.shape
    level = 1 if isinstance(output_size, numbers.Real) else len(output_size)
    sizes = _to_2d_tuples(output_size, level)
    dils = _to_2d_tuples(dilation, level)

    def _pad_or_crop_hw(a, ph, pw):
        if ph >= 0:
            a = jnp.pad(a, ((0, 0), (0, 0), (ph, ph), (0, 0)))
        else:
            a = a[:, :, -ph:a.shape[2] + ph, :]
        if pw >= 0:
            a = jnp.pad(a, ((0, 0), (0, 0), (0, 0), (pw, pw)))
        else:
            a = a[:, :, :, -pw:a.shape[3] + pw]
        return a

    vecs = []
    for s, d in zip(sizes, dils):
        kh, kw, sh, sw, ph, pw, Hp, Wp, oh, ow = _level_geometry(H, W, s, d)
        p = _pad_or_crop_hw(x, ph, pw)
        if pool == 'max':
            r = lax.reduce_window(p, -jnp.inf, lax.max,
                                  (1, 1, kh, kw), (1, 1, sh, sw), 'VALID',
                                  window_dilation=(1, 1, d[0], d[1]))
        else:
            r = lax.reduce_window(p, 0.0, lax.add,
                                  (1, 1, kh, kw), (1, 1, sh, sw), 'VALID',
                                  window_dilation=(1, 1, d[0], d[1])) / float(kh * kw)
        vecs.append(r.reshape(N, -1))
    return jnp.concatenate(vecs, axis=1)


# ----------------------------------------------------------------------------
# tests
# ----------------------------------------------------------------------------

if __name__ == "__main__":
    key = jax.random.PRNGKey(0)
    x = jax.random.normal(key, (2, 4, 16, 16), dtype=jnp.float32)

    for pool in ('max', 'avg'):
        out = jax.block_until_ready(
            dspp2d(x, output_size=(4, 2, 1), dilation=1, pool=pool))
        ref = dspp2d_reference(x, output_size=(4, 2, 1), dilation=1, pool=pool)
        assert out.shape == (2, 4 * (16 + 4 + 1)), out.shape
        assert jnp.allclose(out, ref, atol=1e-5, rtol=1e-5), pool

    # dilated + padded windows, non-multiple-of-128 H*W, lane/NC padding path
    x2 = jax.random.normal(jax.random.PRNGKey(1), (2, 3, 12, 10),
                           dtype=jnp.float32)
    for pool in ('max', 'avg'):
        out = jax.block_until_ready(
            dspp2d(x2, output_size=(4, 2), dilation=(1, 2), pool=pool))
        ref = dspp2d_reference(x2, output_size=(4, 2), dilation=(1, 2), pool=pool)
        assert out.shape == ref.shape, (out.shape, ref.shape)
        assert jnp.allclose(out, ref, atol=1e-5, rtol=1e-5), pool

    # force the chunked selector / accumulator path (odd taps-per-chunk folds)
    out = jax.block_until_ready(
        dspp2d(x, output_size=(4, 2, 1), dilation=1, pool='max',
               max_chunk_cols=300))
    ref = dspp2d_reference(x, output_size=(4, 2, 1), dilation=1, pool='max')
    assert jnp.allclose(out, ref, atol=1e-5, rtol=1e-5)

    print("KERNEL_OK")
</pallas_src>

<mosaic_0001>
module attributes {stable_mosaic.version = 11 : i64} {
  func.func @kernel(%arg0: i32, %arg1: i32, %arg2: memref<8x256xf32, #tpu.memory_space<vmem>>, %arg3: memref<256x768xf32, #tpu.memory_space<vmem>>, %arg4: memref<8x384xf32, #tpu.memory_space<vmem>>, %arg5: memref<8x384xf32, #tpu.memory_space<vmem>>) attributes {dimension_semantics = [#tpu.dimension_semantics<parallel>, #tpu.dimension_semantics<arbitrary>], iteration_bounds = array<i64: 1, 1>, scalar_prefetch = 0 : i64, scratch_operands = 1 : i64, tpu.core_type = #tpu.core_type<tc>, window_params = [{transform_indices = @transform_0, window_bounds = array<i64: 8, 256>}, {transform_indices = @transform_1, window_bounds = array<i64: 256, 768>}, {transform_indices = @transform_2, window_bounds = array<i64: 8, 384>}]} {
    %c0 = arith.constant 0 : index
    %c0_0 = arith.constant 0 : index
    %0 = vector.load %arg2[%c0, %c0_0] : memref<8x256xf32, #tpu.memory_space<vmem>>, vector<8x256xf32>
    %c0_1 = arith.constant 0 : index
    %c0_2 = arith.constant 0 : index
    %1 = vector.load %arg3[%c0_1, %c0_2] : memref<256x768xf32, #tpu.memory_space<vmem>>, vector<256x768xf32>
    %cst = arith.constant dense<0.000000e+00> : vector<8x768xf32>
    %2 = tpu.matmul %0, %1, %cst {dimension_numbers = #tpu.dot_dimension_numbers<[1], [0], [0], [1], [0, 0, 1, 1], [], []>} : vector<8x256xf32>, vector<256x768xf32>, vector<8x768xf32> -> vector<8x768xf32>
    %3 = vector.extract_strided_slice %2 {offsets = [0, 0], sizes = [8, 256], strides = [1, 1]} : vector<8x768xf32> to vector<8x256xf32>
    %4 = vector.extract_strided_slice %3 {offsets = [0, 0], sizes = [8, 128], strides = [1, 1]} : vector<8x256xf32> to vector<8x128xf32>
    %5 = vector.extract_strided_slice %3 {offsets = [0, 128], sizes = [8, 128], strides = [1, 1]} : vector<8x256xf32> to vector<8x128xf32>
    %6 = arith.maximumf %4, %5 : vector<8x128xf32>
    %7 = vector.extract_strided_slice %6 {offsets = [0, 0], sizes = [8, 64], strides = [1, 1]} : vector<8x128xf32> to vector<8x64xf32>
    %8 = vector.extract_strided_slice %6 {offsets = [0, 64], sizes = [8, 64], strides = [1, 1]} : vector<8x128xf32> to vector<8x64xf32>
    %9 = arith.maximumf %7, %8 : vector<8x64xf32>
    %10 = vector.extract_strided_slice %9 {offsets = [0, 0], sizes = [8, 32], strides = [1, 1]} : vector<8x64xf32> to vector<8x32xf32>
    %11 = vector.extract_strided_slice %9 {offsets = [0, 32], sizes = [8, 32], strides = [1, 1]} : vector<8x64xf32> to vector<8x32xf32>
    %12 = arith.maximumf %10, %11 : vector<8x32xf32>
    %13 = vector.extract_strided_slice %12 {offsets = [0, 0], sizes = [8, 16], strides = [1, 1]} : vector<8x32xf32> to vector<8x16xf32>
    %14 = vector.extract_strided_slice %12 {offsets = [0, 16], sizes = [8, 16], strides = [1, 1]} : vector<8x32xf32> to vector<8x16xf32>
    %15 = arith.maximumf %13, %14 : vector<8x16xf32>
    %16 = vector.extract_strided_slice %2 {offsets = [0, 256], sizes = [8, 256], strides = [1, 1]} : vector<8x768xf32> to vector<8x256xf32>
    %17 = vector.extract_strided_slice %16 {offsets = [0, 0], sizes = [8, 128], strides = [1, 1]} : vector<8x256xf32> to vector<8x128xf32>
    %18 = vector.extract_strided_slice %16 {offsets = [0, 128], sizes = [8, 128], strides = [1, 1]} : vector<8x256xf32> to vector<8x128xf32>
    %19 = arith.maximumf %17, %18 : vector<8x128xf32>
    %20 = vector.extract_strided_slice %19 {offsets = [0, 0], sizes = [8, 64], strides = [1, 1]} : vector<8x128xf32> to vector<8x64xf32>
    %21 = vector.extract_strided_slice %19 {offsets = [0, 64], sizes = [8, 64], strides = [1, 1]} : vector<8x128xf32> to vector<8x64xf32>
    %22 = arith.maximumf %20, %21 : vector<8x64xf32>
    %23 = vector.extract_strided_slice %22 {offsets = [0, 0], sizes = [8, 32], strides = [1, 1]} : vector<8x64xf32> to vector<8x32xf32>
    %24 = vector.extract_strided_slice %22 {offsets = [0, 32], sizes = [8, 32], strides = [1, 1]} : vector<8x64xf32> to vector<8x32xf32>
    %25 = arith.maximumf %23, %24 : vector<8x32xf32>
    %26 = vector.extract_strided_slice %25 {offsets = [0, 0], sizes = [8, 16], strides = [1, 1]} : vector<8x32xf32> to vector<8x16xf32>
    %27 = vector.extract_strided_slice %25 {offsets = [0, 16], sizes = [8, 16], strides = [1, 1]} : vector<8x32xf32> to vector<8x16xf32>
    %28 = arith.maximumf %26, %27 : vector<8x16xf32>
    %29 = vector.extract_strided_slice %28 {offsets = [0, 0], sizes = [8, 8], strides = [1, 1]} : vector<8x16xf32> to vector<8x8xf32>
    %30 = vector.extract_strided_slice %28 {offsets = [0, 8], sizes = [8, 8], strides = [1, 1]} : vector<8x16xf32> to vector<8x8xf32>
    %31 = arith.maximumf %29, %30 : vector<8x8xf32>
    %32 = vector.extract_strided_slice %31 {offsets = [0, 0], sizes = [8, 4], strides = [1, 1]} : vector<8x8xf32> to vector<8x4xf32>
    %33 = vector.extract_strided_slice %31 {offsets = [0, 4], sizes = [8, 4], strides = [1, 1]} : vector<8x8xf32> to vector<8x4xf32>
    %34 = arith.maximumf %32, %33 : vector<8x4xf32>
    %35 = vector.extract_strided_slice %2 {offsets = [0, 512], sizes = [8, 256], strides = [1, 1]} : vector<8x768xf32> to vector<8x256xf32>
    %36 = vector.extract_strided_slice %35 {offsets = [0, 0], sizes = [8, 128], strides = [1, 1]} : vector<8x256xf32> to vector<8x128xf32>
    %37 = vector.extract_strided_slice %35 {offsets = [0, 128], sizes = [8, 128], strides = [1, 1]} : vector<8x256xf32> to vector<8x128xf32>
    %38 = arith.maximumf %36, %37 : vector<8x128xf32>
    %39 = vector.extract_strided_slice %38 {offsets = [0, 0], sizes = [8, 64], strides = [1, 1]} : vector<8x128xf32> to vector<8x64xf32>
    %40 = vector.extract_strided_slice %38 {offsets = [0, 64], sizes = [8, 64], strides = [1, 1]} : vector<8x128xf32> to vector<8x64xf32>
    %41 = arith.maximumf %39, %40 : vector<8x64xf32>
    %42 = vector.extract_strided_slice %41 {offsets = [0, 0], sizes = [8, 32], strides = [1, 1]} : vector<8x64xf32> to vector<8x32xf32>
    %43 = vector.extract_strided_slice %41 {offsets = [0, 32], sizes = [8, 32], strides = [1, 1]} : vector<8x64xf32> to vector<8x32xf32>
    %44 = arith.maximumf %42, %43 : vector<8x32xf32>
    %45 = vector.extract_strided_slice %44 {offsets = [0, 0], sizes = [8, 16], strides = [1, 1]} : vector<8x32xf32> to vector<8x16xf32>
    %46 = vector.extract_strided_slice %44 {offsets = [0, 16], sizes = [8, 16], strides = [1, 1]} : vector<8x32xf32> to vector<8x16xf32>
    %47 = arith.maximumf %45, %46 : vector<8x16xf32>
    %48 = vector.extract_strided_slice %47 {offsets = [0, 0], sizes = [8, 8], strides = [1, 1]} : vector<8x16xf32> to vector<8x8xf32>
    %49 = vector.extract_strided_slice %47 {offsets = [0, 8], sizes = [8, 8], strides = [1, 1]} : vector<8x16xf32> to vector<8x8xf32>
    %50 = arith.maximumf %48, %49 : vector<8x8xf32>
    %51 = vector.extract_strided_slice %50 {offsets = [0, 0], sizes = [8, 4], strides = [1, 1]} : vector<8x8xf32> to vector<8x4xf32>
    %52 = vector.extract_strided_slice %50 {offsets = [0, 4], sizes = [8, 4], strides = [1, 1]} : vector<8x8xf32> to vector<8x4xf32>
    %53 = arith.maximumf %51, %52 : vector<8x4xf32>
    %54 = vector.extract_strided_slice %53 {offsets = [0, 0], sizes = [8, 2], strides = [1, 1]} : vector<8x4xf32> to vector<8x2xf32>
    %55 = vector.extract_strided_slice %53 {offsets = [0, 2], sizes = [8, 2], strides = [1, 1]} : vector<8x4xf32> to vector<8x2xf32>
    %56 = arith.maximumf %54, %55 : vector<8x2xf32>
    %57 = vector.extract_strided_slice %56 {offsets = [0, 0], sizes = [8, 1], strides = [1, 1]} : vector<8x2xf32> to vector<8x1xf32>
    %58 = vector.extract_strided_slice %56 {offsets = [0, 1], sizes = [8, 1], strides = [1, 1]} : vector<8x2xf32> to vector<8x1xf32>
    %59 = arith.maximumf %57, %58 : vector<8x1xf32>
    %c0_i32 = arith.constant 0 : i32
    %60 = arith.cmpi eq, %arg1, %c0_i32 : i32
    %61 = arith.extui %60 : i1 to i32
    %c0_i32_3 = arith.constant 0 : i32
    %62 = arith.cmpi ne, %61, %c0_i32_3 : i32
    scf.if %62 {
      %cst_16 = arith.constant 0xFF800000 : f32
      %75 = vector.broadcast %cst_16 : f32 to vector<8x384xf32>
      %c0_17 = arith.constant 0 : index
      %c0_18 = arith.constant 0 : index
      %76 = vector.load %arg5[%c0_17, %c0_18] : memref<8x384xf32, #tpu.memory_space<vmem>>, vector<8x384xf32>
      tpu.vector_store %arg5[%c0_17, %c0_18], %75 {strides = array<i32>} : memref<8x384xf32, #tpu.memory_space<vmem>>, vector<8x384xf32>,
    } else {
    }
    %c0_4 = arith.constant 0 : index
    %c0_5 = arith.constant 0 : index
    %63 = vector.load %arg5[%c0_4, %c0_5] : memref<8x384xf32, #tpu.memory_space<vmem>>, vector<8x16xf32>
    %64 = arith.maximumf %63, %15 : vector<8x16xf32>
    %c0_6 = arith.constant 0 : index
    %c0_7 = arith.constant 0 : index
    %65 = vector.load %arg5[%c0_6, %c0_7] : memref<8x384xf32, #tpu.memory_space<vmem>>, vector<8x16xf32>
    tpu.vector_store %arg5[%c0_6, %c0_7], %64 {strides = array<i32>} : memref<8x384xf32, #tpu.memory_space<vmem>>, vector<8x16xf32>,
    %c0_8 = arith.constant 0 : index
    %c128 = arith.constant 128 : index
    %66 = vector.load %arg5[%c0_8, %c128] : memref<8x384xf32, #tpu.memory_space<vmem>>, vector<8x4xf32>
    %67 = arith.maximumf %66, %34 : vector<8x4xf32>
    %c0_9 = arith.constant 0 : index
    %c128_10 = arith.constant 128 : index
    %68 = vector.load %arg5[%c0_9, %c128_10] : memref<8x384xf32, #tpu.memory_space<vmem>>, vector<8x4xf32>
    tpu.vector_store %arg5[%c0_9, %c128_10], %67 {strides = array<i32>} : memref<8x384xf32, #tpu.memory_space<vmem>>, vector<8x4xf32>,
    %c0_11 = arith.constant 0 : index
    %c256 = arith.constant 256 : index
    %69 = vector.load %arg5[%c0_11, %c256] : memref<8x384xf32, #tpu.memory_space<vmem>>, vector<8x1xf32>
    %70 = arith.maximumf %69, %59 : vector<8x1xf32>
    %c0_12 = arith.constant 0 : index
    %c256_13 = arith.constant 256 : index
    %71 = vector.load %arg5[%c0_12, %c256_13] : memref<8x384xf32, #tpu.memory_space<vmem>>, vector<8x1xf32>
    tpu.vector_store %arg5[%c0_12, %c256_13], %70 {strides = array<i32>} : memref<8x384xf32, #tpu.memory_space<vmem>>, vector<8x1xf32>,
    %c0_i32_14 = arith.constant 0 : i32
    %72 = arith.cmpi eq, %arg1, %c0_i32_14 : i32
    %73 = arith.extui %72 : i1 to i32
    %c0_i32_15 = arith.constant 0 : i32
    %74 = arith.cmpi ne, %73, %c0_i32_15 : i32
    scf.if %74 {
      %c0_16 = arith.constant 0 : index
      %c0_17 = arith.constant 0 : index
      %75 = vector.load %arg5[%c0_16, %c0_17] : memref<8x384xf32, #tpu.memory_space<vmem>>, vector<8x128xf32>
      %c0_18 = arith.constant 0 : index
      %c0_19 = arith.constant 0 : index
      %76 = vector.load %arg4[%c0_18, %c0_19] : memref<8x384xf32, #tpu.memory_space<vmem>>, vector<8x128xf32>
      tpu.vector_store %arg4[%c0_18, %c0_19], %75 {strides = array<i32>} : memref<8x384xf32, #tpu.memory_space<vmem>>, vector<8x128xf32>,
      %c0_20 = arith.constant 0 : index
      %c128_21 = arith.constant 128 : index
      %77 = vector.load %arg5[%c0_20, %c128_21] : memref<8x384xf32, #tpu.memory_space<vmem>>, vector<8x128xf32>
      %c0_22 = arith.constant 0 : index
      %c128_23 = arith.constant 128 : index
      %78 = vector.load %arg4[%c0_22, %c128_23] : memref<8x384xf32, #tpu.memory_space<vmem>>, vector<8x128xf32>
      tpu.vector_store %arg4[%c0_22, %c128_23], %77 {strides = array<i32>} : memref<8x384xf32, #tpu.memory_space<vmem>>, vector<8x128xf32>,
      %c0_24 = arith.constant 0 : index
      %c256_25 = arith.constant 256 : index
      %79 = vector.load %arg5[%c0_24, %c256_25] : memref<8x384xf32, #tpu.memory_space<vmem>>, vector<8x128xf32>
      %c0_26 = arith.constant 0 : index
      %c256_27 = arith.constant 256 : index
      %80 = vector.load %arg4[%c0_26, %c256_27] : memref<8x384xf32, #tpu.memory_space<vmem>>, vector<8x128xf32>
      tpu.vector_store %arg4[%c0_26, %c256_27], %79 {strides = array<i32>} : memref<8x384xf32, #tpu.memory_space<vmem>>, vector<8x128xf32>,
    } else {
    }
    return
  }
  func.func @transform_0(%arg0: i32, %arg1: i32) -> (i32, i32) {
    %c0_i32 = arith.constant 0 : i32
    %c0_i32_0 = arith.constant 0 : i32
    return %arg0, %c0_i32 : i32, i32
  }
  func.func @transform_1(%arg0: i32, %arg1: i32) -> (i32, i32) {
    %c0_i32 = arith.constant 0 : i32
    %c0_i32_0 = arith.constant 0 : i32
    return %c0_i32, %arg1 : i32, i32
  }
  func.func @transform_2(%arg0: i32, %arg1: i32) -> (i32, i32) {
    %c0_i32 = arith.constant 0 : i32
    %c0_i32_0 = arith.constant 0 : i32
    return %arg0, %c0_i32 : i32, i32
  }
}

</mosaic_0001>

<llo_original>
// kernel: tpu_custom_call.1
$region0: #{tpu_custom_call.1}
  #allocation0 [shape = 'u32[]', space=smem, size = 0x4, offset = 0x4, fixed_abs, tag = 'smem constant byte address 0x4 - core index']
  #allocation1 [shape = 'u32[144,128]{1,0:T(1,128)}', space=vmem, size = 0x12000, scoped, tag = 'internal scratch']
  #allocation2 [shape = 'f32[8,384]{1,0:T(8,128)}', space=vmem, size = 0x3000, scoped, tag = 'scratch operand']
  %s0 = inlined_call_operand.hbm [shape: f32[8,256], index: 0, kind: input, shape index: {}]
  %s1 = inlined_call_operand.hbm [shape: f32[256,768], index: 1, kind: input, shape index: {}]
  %s2 = inlined_call_operand.hbm [shape: f32[8,384], index: 2, kind: output, shape index: {}]
  %s3 = sld [smem:[#allocation0]]
  $region34: #{tpu_custom_call.1} parent=0
    _
  %s5 = ssub.s32 1, %s3
  %s6 = scalar_select 0, %s5, %s3
  $region1: #{tpu_custom_call.1} parent=0
    #allocation3 [shape = 'u8[8192]{0}', space=vmem, size = 0x2000, scoped, tag = 'input window, operand 0, single buffered']
    #allocation4 [shape = 's32[1]{0}', space=sflag, size = 0x4, scoped, tag = 'scoped memory for tpu_custom_call.1']
    #allocation5 [shape = 's32[1]{0}', space=sflag, size = 0x4, scoped, tag = 'scoped memory for tpu_custom_call.1']
    #allocation6 [shape = 'u8[786432]{0}', space=vmem, size = 0xc0000, scoped, tag = 'input window, operand 1, single buffered']
    #allocation7 [shape = 's32[1]{0}', space=sflag, size = 0x4, scoped, tag = 'scoped memory for tpu_custom_call.1']
    #allocation8 [shape = 'u8[12288]{0}', space=vmem, size = 0x3000, scoped, tag = 'output window, operand 0, single buffered']
    %7 = vsyncpa [#allocation4], 0
    %8 = vsyncpa [#allocation7], 0
    %9 = vsyncpa [#allocation5], 0
    // Predicated region
    $region2: #{tpu_custom_call.1} parent=1 // pred_check
      _
    $region3: #{tpu_custom_call.1} parent=1 // pred_check_branch
      %11 = sbr.rel (0) target = $region5
    $region4: #{tpu_custom_call.1} parent=1 // pred_region
      %s13 = ssub.s32 256, 256
      %14 = vsyncadd [#allocation4], %s13
      %s16 = sshll.u32 [#allocation3], 4
      %s17 = int_to_ptr.vmem [resolvable:$true] %s16
      %19 = dma.hbm_to_vmem [thread:$0]  %s0, 256, %s17, [#allocation4]
    $region5: #{tpu_custom_call.1} parent=1 // pred_fallthru
      _
    // Predicated region
    $region6: #{tpu_custom_call.1} parent=1 // pred_check
      _
    $region7: #{tpu_custom_call.1} parent=1 // pred_check_branch
      %21 = sbr.rel (0) target = $region9
    $region8: #{tpu_custom_call.1} parent=1 // pred_region
      %s23 = ssub.s32 24576, 24576
      %24 = vsyncadd [#allocation7], %s23
      %s25 = sshll.u32 [#allocation6], 4
      %s26 = int_to_ptr.vmem [resolvable:$true] %s25
      %31 = dma.hbm_to_vmem [thread:$0]  %s1, 24576, %s26, [#allocation7], 768, 768, 48
    $region9: #{tpu_custom_call.1} parent=1 // pred_fallthru
      _
    // Predicated region
    $region10: #{tpu_custom_call.1} parent=1 // pred_check
      _
    $region11: #{tpu_custom_call.1} parent=1 // pred_check_branch
      %33 = sbr.rel (0) target = $region13
    $region12: #{tpu_custom_call.1} parent=1 // pred_region
      %34 = dma.done [#allocation4], 256
    $region13: #{tpu_custom_call.1} parent=1 // pred_fallthru
      _
    // Predicated region
    $region14: #{tpu_custom_call.1} parent=1 // pred_check
      _
    $region15: #{tpu_custom_call.1} parent=1 // pred_check_branch
      %36 = sbr.rel (0) target = $region17
    $region16: #{tpu_custom_call.1} parent=1 // pred_region
      %37 = dma.done [#allocation7], 24576
    $region17: #{tpu_custom_call.1} parent=1 // pred_fallthru
      _
    %v38 = vld [vmem:[#allocation3] sm:$0xff]
    %v39 = vld [vmem:[#allocation3 + $0x8] sm:$0xff]
    %v40 = vld [vmem:[#allocation6] sm:$0xff]
    %v41 = vld [vmem:[#allocation6 + $0x8] sm:$0xff]
    %v42 = vld [vmem:[#allocation6 + $0x10] sm:$0xff]
    %v43 = vld [vmem:[#allocation6 + $0x18] sm:$0xff]
    %v44 = vld [vmem:[#allocation6 + $0x20] sm:$0xff]
    %v45 = vld [vmem:[#allocation6 + $0x28] sm:$0xff]
    %v46 = vld [vmem:[#allocation6 + $0x30] sm:$0xff]
    %v47 = vld [vmem:[#allocation6 + $0x38] sm:$0xff]
    %v48 = vld [vmem:[#allocation6 + $0x40] sm:$0xff]
    %v49 = vld [vmem:[#allocation6 + $0x48] sm:$0xff]
    %v50 = vld [vmem:[#allocation6 + $0x50] sm:$0xff]
    %v51 = vld [vmem:[#allocation6 + $0x58] sm:$0xff]
    %v52 = vld [vmem:[#allocation6 + $0x60] sm:$0xff]
    %v53 = vld [vmem:[#allocation6 + $0x68] sm:$0xff]
    %v54 = vld [vmem:[#allocation6 + $0x70] sm:$0xff]
    %v55 = vld [vmem:[#allocation6 + $0x78] sm:$0xff]
    %v56 = vld [vmem:[#allocation6 + $0x80] sm:$0xff]
    %v57 = vld [vmem:[#allocation6 + $0x88] sm:$0xff]
    %v58 = vld [vmem:[#allocation6 + $0x90] sm:$0xff]
    %v59 = vld [vmem:[#allocation6 + $0x98] sm:$0xff]
    %v60 = vld [vmem:[#allocation6 + $0xa0] sm:$0xff]
    %v61 = vld [vmem:[#allocation6 + $0xa8] sm:$0xff]
    %v62 = vld [vmem:[#allocation6 + $0xb0] sm:$0xff]
    %v63 = vld [vmem:[#allocation6 + $0xb8] sm:$0xff]
    %v64 = vld [vmem:[#allocation6 + $0xc0] sm:$0xff]
    %v65 = vld [vmem:[#allocation6 + $0xc8] sm:$0xff]
    %v66 = vld [vmem:[#allocation6 + $0xd0] sm:$0xff]
    %v67 = vld [vmem:[#allocation6 + $0xd8] sm:$0xff]
    %v68 = vld [vmem:[#allocation6 + $0xe0] sm:$0xff]
    %v69 = vld [vmem:[#allocation6 + $0xe8] sm:$0xff]
    %v70 = vld [vmem:[#allocation6 + $0xf0] sm:$0xff]
    %v71 = vld [vmem:[#allocation6 + $0xf8] sm:$0xff]
    %v72 = vld [vmem:[#allocation6 + $0x100] sm:$0xff]
    %v73 = vld [vmem:[#allocation6 + $0x108] sm:$0xff]
    %v74 = vld [vmem:[#allocation6 + $0x110] sm:$0xff]
    %v75 = vld [vmem:[#allocation6 + $0x118] sm:$0xff]
    %v76 = vld [vmem:[#allocation6 + $0x120] sm:$0xff]
    %v77 = vld [vmem:[#allocation6 + $0x128] sm:$0xff]
    %v78 = vld [vmem:[#allocation6 + $0x130] sm:$0xff]
    %v79 = vld [vmem:[#allocation6 + $0x138] sm:$0xff]
    %v80 = vld [vmem:[#allocation6 + $0x140] sm:$0xff]
    %v81 = vld [vmem:[#allocation6 + $0x148] sm:$0xff]
    %v82 = vld [vmem:[#allocation6 + $0x150] sm:$0xff]
    %v83 = vld [vmem:[#allocation6 + $0x158] sm:$0xff]
    %v84 = vld [vmem:[#allocation6 + $0x160] sm:$0xff]
    %v85 = vld [vmem:[#allocation6 + $0x168] sm:$0xff]
    %v86 = vld [vmem:[#allocation6 + $0x170] sm:$0xff]
    %v87 = vld [vmem:[#allocation6 + $0x178] sm:$0xff]
    %v88 = vld [vmem:[#allocation6 + $0x180] sm:$0xff]
    %v89 = vld [vmem:[#allocation6 + $0x188] sm:$0xff]
    %v90 = vld [vmem:[#allocation6 + $0x190] sm:$0xff]
    %v91 = vld [vmem:[#allocation6 + $0x198] sm:$0xff]
    %v92 = vld [vmem:[#allocation6 + $0x1a0] sm:$0xff]
    %v93 = vld [vmem:[#allocation6 + $0x1a8] sm:$0xff]
    %v94 = vld [vmem:[#allocation6 + $0x1b0] sm:$0xff]
    %v95 = vld [vmem:[#allocation6 + $0x1b8] sm:$0xff]
    %v96 = vld [vmem:[#allocation6 + $0x1c0] sm:$0xff]
    %v97 = vld [vmem:[#allocation6 + $0x1c8] sm:$0xff]
    %v98 = vld [vmem:[#allocation6 + $0x1d0] sm:$0xff]
    %v99 = vld [vmem:[#allocation6 + $0x1d8] sm:$0xff]
    %v100 = vld [vmem:[#allocation6 + $0x1e0] sm:$0xff]
    %v101 = vld [vmem:[#allocation6 + $0x1e8] sm:$0xff]
    %v102 = vld [vmem:[#allocation6 + $0x1f0] sm:$0xff]
    %v103 = vld [vmem:[#allocation6 + $0x1f8] sm:$0xff]
    %v104 = vld [vmem:[#allocation6 + $0x200] sm:$0xff]
    %v105 = vld [vmem:[#allocation6 + $0x208] sm:$0xff]
    %v106 = vld [vmem:[#allocation6 + $0x210] sm:$0xff]
    %v107 = vld [vmem:[#allocation6 + $0x218] sm:$0xff]
    %v108 = vld [vmem:[#allocation6 + $0x220] sm:$0xff]
    %v109 = vld [vmem:[#allocation6 + $0x228] sm:$0xff]
    %v110 = vld [vmem:[#allocation6 + $0x230] sm:$0xff]
    %v111 = vld [vmem:[#allocation6 + $0x238] sm:$0xff]
    %v112 = vld [vmem:[#allocation6 + $0x240] sm:$0xff]
    %v113 = vld [vmem:[#allocation6 + $0x248] sm:$0xff]
    %v114 = vld [vmem:[#allocation6 + $0x250] sm:$0xff]
    %v115 = vld [vmem:[#allocation6 + $0x258] sm:$0xff]
    %v116 = vld [vmem:[#allocation6 + $0x260] sm:$0xff]
    %v117 = vld [vmem:[#allocation6 + $0x268] sm:$0xff]
    %v118 = vld [vmem:[#allocation6 + $0x270] sm:$0xff]
    %v119 = vld [vmem:[#allocation6 + $0x278] sm:$0xff]
    %v120 = vld [vmem:[#allocation6 + $0x280] sm:$0xff]
    %v121 = vld [vmem:[#allocation6 + $0x288] sm:$0xff]
    %v122 = vld [vmem:[#allocation6 + $0x290] sm:$0xff]
    %v123 = vld [vmem:[#allocation6 + $0x298] sm:$0xff]
    %v124 = vld [vmem:[#allocation6 + $0x2a0] sm:$0xff]
    %v125 = vld [vmem:[#allocation6 + $0x2a8] sm:$0xff]
    %v126 = vld [vmem:[#allocation6 + $0x2b0] sm:$0xff]
    %v127 = vld [vmem:[#allocation6 + $0x2b8] sm:$0xff]
    %v128 = vld [vmem:[#allocation6 + $0x2c0] sm:$0xff]
    %v129 = vld [vmem:[#allocation6 + $0x2c8] sm:$0xff]
    %v130 = vld [vmem:[#allocation6 + $0x2d0] sm:$0xff]
    %v131 = vld [vmem:[#allocation6 + $0x2d8] sm:$0xff]
    %v132 = vld [vmem:[#allocation6 + $0x2e0] sm:$0xff]
    %v133 = vld [vmem:[#allocation6 + $0x2e8] sm:$0xff]
    %v134 = vld [vmem:[#allocation6 + $0x2f0] sm:$0xff]
    %v135 = vld [vmem:[#allocation6 + $0x2f8] sm:$0xff]
    %v136 = vld [vmem:[#allocation6 + $0x300] sm:$0xff]
    %v137 = vld [vmem:[#allocation6 + $0x308] sm:$0xff]
    %v138 = vld [vmem:[#allocation6 + $0x310] sm:$0xff]
    %v139 = vld [vmem:[#allocation6 + $0x318] sm:$0xff]
    %v140 = vld [vmem:[#allocation6 + $0x320] sm:$0xff]
    %v141 = vld [vmem:[#allocation6 + $0x328] sm:$0xff]
    %v142 = vld [vmem:[#allocation6 + $0x330] sm:$0xff]
    %v143 = vld [vmem:[#allocation6 + $0x338] sm:$0xff]
    %v144 = vld [vmem:[#allocation6 + $0x340] sm:$0xff]
    %v145 = vld [vmem:[#allocation6 + $0x348] sm:$0xff]
    %v146 = vld [vmem:[#allocation6 + $0x350] sm:$0xff]
    %v147 = vld [vmem:[#allocation6 + $0x358] sm:$0xff]
    %v148 = vld [vmem:[#allocation6 + $0x360] sm:$0xff]
    %v149 = vld [vmem:[#allocation6 + $0x368] sm:$0xff]
    %v150 = vld [vmem:[#allocation6 + $0x370] sm:$0xff]
    %v151 = vld [vmem:[#allocation6 + $0x378] sm:$0xff]
    %v152 = vld [vmem:[#allocation6 + $0x380] sm:$0xff]
    %v153 = vld [vmem:[#allocation6 + $0x388] sm:$0xff]
    %v154 = vld [vmem:[#allocation6 + $0x390] sm:$0xff]
    %v155 = vld [vmem:[#allocation6 + $0x398] sm:$0xff]
    %v156 = vld [vmem:[#allocation6 + $0x3a0] sm:$0xff]
    %v157 = vld [vmem:[#allocation6 + $0x3a8] sm:$0xff]
    %v158 = vld [vmem:[#allocation6 + $0x3b0] sm:$0xff]
    %v159 = vld [vmem:[#allocation6 + $0x3b8] sm:$0xff]
    %v160 = vld [vmem:[#allocation6 + $0x3c0] sm:$0xff]
    %v161 = vld [vmem:[#allocation6 + $0x3c8] sm:$0xff]
    %v162 = vld [vmem:[#allocation6 + $0x3d0] sm:$0xff]
    %v163 = vld [vmem:[#allocation6 + $0x3d8] sm:$0xff]
    %v164 = vld [vmem:[#allocation6 + $0x3e0] sm:$0xff]
    %v165 = vld [vmem:[#allocation6 + $0x3e8] sm:$0xff]
    %v166 = vld [vmem:[#allocation6 + $0x3f0] sm:$0xff]
    %v167 = vld [vmem:[#allocation6 + $0x3f8] sm:$0xff]
    %v168 = vld [vmem:[#allocation6 + $0x400] sm:$0xff]
    %v169 = vld [vmem:[#allocation6 + $0x408] sm:$0xff]
    %v170 = vld [vmem:[#allocation6 + $0x410] sm:$0xff]
    %v171 = vld [vmem:[#allocation6 + $0x418] sm:$0xff]
    %v172 = vld [vmem:[#allocation6 + $0x420] sm:$0xff]
    %v173 = vld [vmem:[#allocation6 + $0x428] sm:$0xff]
    %v174 = vld [vmem:[#allocation6 + $0x430] sm:$0xff]
    %v175 = vld [vmem:[#allocation6 + $0x438] sm:$0xff]
    %v176 = vld [vmem:[#allocation6 + $0x440] sm:$0xff]
    %v177 = vld [vmem:[#allocation6 + $0x448] sm:$0xff]
    %v178 = vld [vmem:[#allocation6 + $0x450] sm:$0xff]
    %v179 = vld [vmem:[#allocation6 + $0x458] sm:$0xff]
    %v180 = vld [vmem:[#allocation6 + $0x460] sm:$0xff]
    %v181 = vld [vmem:[#allocation6 + $0x468] sm:$0xff]
    %v182 = vld [vmem:[#allocation6 + $0x470] sm:$0xff]
    %v183 = vld [vmem:[#allocation6 + $0x478] sm:$0xff]
    %v184 = vld [vmem:[#allocation6 + $0x480] sm:$0xff]
    %v185 = vld [vmem:[#allocation6 + $0x488] sm:$0xff]
    %v186 = vld [vmem:[#allocation6 + $0x490] sm:$0xff]
    %v187 = vld [vmem:[#allocation6 + $0x498] sm:$0xff]
    %v188 = vld [vmem:[#allocation6 + $0x4a0] sm:$0xff]
    %v189 = vld [vmem:[#allocation6 + $0x4a8] sm:$0xff]
    %v190 = vld [vmem:[#allocation6 + $0x4b0] sm:$0xff]
    %v191 = vld [vmem:[#allocation6 + $0x4b8] sm:$0xff]
    %v192 = vld [vmem:[#allocation6 + $0x4c0] sm:$0xff]
    %v193 = vld [vmem:[#allocation6 + $0x4c8] sm:$0xff]
    %v194 = vld [vmem:[#allocation6 + $0x4d0] sm:$0xff]
    %v195 = vld [vmem:[#allocation6 + $0x4d8] sm:$0xff]
    %v196 = vld [vmem:[#allocation6 + $0x4e0] sm:$0xff]
    %v197 = vld [vmem:[#allocation6 + $0x4e8] sm:$0xff]
    %v198 = vld [vmem:[#allocation6 + $0x4f0] sm:$0xff]
    %v199 = vld [vmem:[#allocation6 + $0x4f8] sm:$0xff]
    %v200 = vld [vmem:[#allocation6 + $0x500] sm:$0xff]
    %v201 = vld [vmem:[#allocation6 + $0x508] sm:$0xff]
    %v202 = vld [vmem:[#allocation6 + $0x510] sm:$0xff]
    %v203 = vld [vmem:[#allocation6 + $0x518] sm:$0xff]
    %v204 = vld [vmem:[#allocation6 + $0x520] sm:$0xff]
    %v205 = vld [vmem:[#allocation6 + $0x528] sm:$0xff]
    %v206 = vld [vmem:[#allocation6 + $0x530] sm:$0xff]
    %v207 = vld [vmem:[#allocation6 + $0x538] sm:$0xff]
    %v208 = vld [vmem:[#allocation6 + $0x540] sm:$0xff]
    %v209 = vld [vmem:[#allocation6 + $0x548] sm:$0xff]
    %v210 = vld [vmem:[#allocation6 + $0x550] sm:$0xff]
    %v211 = vld [vmem:[#allocation6 + $0x558] sm:$0xff]
    %v212 = vld [vmem:[#allocation6 + $0x560] sm:$0xff]
    %v213 = vld [vmem:[#allocation6 + $0x568] sm:$0xff]
    %v214 = vld [vmem:[#allocation6 + $0x570] sm:$0xff]
    %v215 = vld [vmem:[#allocation6 + $0x578] sm:$0xff]
    %v216 = vld [vmem:[#allocation6 + $0x580] sm:$0xff]
    %v217 = vld [vmem:[#allocation6 + $0x588] sm:$0xff]
    %v218 = vld [vmem:[#allocation6 + $0x590] sm:$0xff]
    %v219 = vld [vmem:[#allocation6 + $0x598] sm:$0xff]
    %v220 = vld [vmem:[#allocation6 + $0x5a0] sm:$0xff]
    %v221 = vld [vmem:[#allocation6 + $0x5a8] sm:$0xff]
    %v222 = vld [vmem:[#allocation6 + $0x5b0] sm:$0xff]
    %v223 = vld [vmem:[#allocation6 + $0x5b8] sm:$0xff]
    %v224 = vld [vmem:[#allocation6 + $0x5c0] sm:$0xff]
    %v225 = vld [vmem:[#allocation6 + $0x5c8] sm:$0xff]
    %v226 = vld [vmem:[#allocation6 + $0x5d0] sm:$0xff]
    %v227 = vld [vmem:[#allocation6 + $0x5d8] sm:$0xff]
    %v228 = vld [vmem:[#allocation6 + $0x5e0] sm:$0xff]
    %v229 = vld [vmem:[#allocation6 + $0x5e8] sm:$0xff]
    %v230 = vld [vmem:[#allocation6 + $0x5f0] sm:$0xff]
    %v231 = vld [vmem:[#allocation6 + $0x5f8] sm:$0xff]
    %232 = vmatprep.subr.mxu0 %v41
    %233 = vmatpush1.msra.mxu0 %v40
    %234 = vmatprep.subr.mxu0 %v47
    %235 = vmatpush1.msra.mxu0 %v46
    %236 = vmatprep.subr.mxu0 %v53
    %237 = vmatpush1.msra.mxu0 %v52
    %238 = vmatprep.subr.mxu0 %v59
    %239 = vmatpush1.msra.mxu0 %v58
    %240 = vmatprep.subr.mxu0 %v65
    %241 = vmatpush1.msra.mxu0 %v64
    %242 = vmatprep.subr.mxu0 %v71
    %243 = vmatpush1.msra.mxu0 %v70
    %244 = vmatprep.subr.mxu0 %v77
    %245 = vmatpush1.msra.mxu0 %v76
    %246 = vmatprep.subr.mxu0 %v83
    %247 = vmatpush1.msra.mxu0 %v82
    %248 = vmatprep.subr.mxu0 %v89
    %249 = vmatpush1.msra.mxu0 %v88
    %250 = vmatprep.subr.mxu0 %v95
    %251 = vmatpush1.msra.mxu0 %v94
    %252 = vmatprep.subr.mxu0 %v101
    %253 = vmatpush1.msra.mxu0 %v100
    %254 = vmatprep.subr.mxu0 %v107
    %255 = vmatpush1.msra.mxu0 %v106
    %256 = vmatprep.subr.mxu0 %v113
    %257 = vmatpush1.msra.mxu0 %v112
    %258 = vmatprep.subr.mxu0 %v119
    %259 = vmatpush1.msra.mxu0 %v118
    %260 = vmatprep.subr.mxu0 %v125
    %261 = vmatpush1.msra.mxu0 %v124
    %262 = vmatprep.subr.mxu0 %v131
    %263 = vmatpush1.msra.mxu0 %v130
    %264 = vmatprep.subr.mxu0 %v137
    %265 = vmatpush1.msra.mxu0 %v136
    %266 = vmatprep.subr.mxu0 %v143
    %267 = vmatpush1.msra.mxu0 %v142
    %268 = vmatprep.subr.mxu0 %v149
    %269 = vmatpush1.msra.mxu0 %v148
    %270 = vmatprep.subr.mxu0 %v155
    %271 = vmatpush1.msra.mxu0 %v154
    %272 = vmatprep.subr.mxu0 %v161
    %273 = vmatpush1.msra.mxu0 %v160
    %274 = vmatprep.subr.mxu0 %v167
    %275 = vmatpush1.msra.mxu0 %v166
    %276 = vmatprep.subr.mxu0 %v173
    %277 = vmatpush1.msra.mxu0 %v172
    %278 = vmatprep.subr.mxu0 %v179
    %279 = vmatpush1.msra.mxu0 %v178
    %280 = vmatprep.subr.mxu0 %v185
    %281 = vmatpush1.msra.mxu0 %v184
    %282 = vmatprep.subr.mxu0 %v191
    %283 = vmatpush1.msra.mxu0 %v190
    %284 = vmatprep.subr.mxu0 %v197
    %285 = vmatpush1.msra.mxu0 %v196
    %286 = vmatprep.subr.mxu0 %v203
    %287 = vmatpush1.msra.mxu0 %v202
    %288 = vmatprep.subr.mxu0 %v209
    %289 = vmatpush1.msra.mxu0 %v208
    %290 = vmatprep.subr.mxu0 %v215
    %291 = vmatpush1.msra.mxu0 %v214
    %292 = vmatprep.subr.mxu0 %v221
    %293 = vmatpush1.msra.mxu0 %v220
    %294 = vmatprep.subr.mxu0 %v227
    %295 = vmatpush1.msra.mxu0 %v226
    %296 = vmatprep.mubr.f32.mxu0 %v39
    %297 = vmatmul.mubr.f32.gmra.mrb[0].mxu0 %v38
    %v298 = vpop.f32.mrb[0].mxu0
    %v299 = vadd.f32 0.0, %v298
    %v300 = vpop.f32.mrb[0].mxu0
    %v301 = vadd.f32 0.0, %v300
    %302 = vdwg.mxu0
    %303 = vmatprep.subr.mxu0 %v43
    %304 = vmatpush1.msra.mxu0 %v42
    %305 = vmatprep.subr.mxu0 %v49
    %306 = vmatpush1.msra.mxu0 %v48
    %307 = vmatprep.subr.mxu0 %v55
    %308 = vmatpush1.msra.mxu0 %v54
    %309 = vmatprep.subr.mxu0 %v61
    %310 = vmatpush1.msra.mxu0 %v60
    %311 = vmatprep.subr.mxu0 %v67
    %312 = vmatpush1.msra.mxu0 %v66
    %313 = vmatprep.subr.mxu0 %v73
    %314 = vmatpush1.msra.mxu0 %v72
    %315 = vmatprep.subr.mxu0 %v79
    %316 = vmatpush1.msra.mxu0 %v78
    %317 = vmatprep.subr.mxu0 %v85
    %318 = vmatpush1.msra.mxu0 %v84
    %319 = vmatprep.subr.mxu0 %v91
    %320 = vmatpush1.msra.mxu0 %v90
    %321 = vmatprep.subr.mxu0 %v97
    %322 = vmatpush1.msra.mxu0 %v96
    %323 = vmatprep.subr.mxu0 %v103
    %324 = vmatpush1.msra.mxu0 %v102
    %325 = vmatprep.subr.mxu0 %v109
    %326 = vmatpush1.msra.mxu0 %v108
    %327 = vmatprep.subr.mxu0 %v115
    %328 = vmatpush1.msra.mxu0 %v114
    %329 = vmatprep.subr.mxu0 %v121
    %330 = vmatpush1.msra.mxu0 %v120
    %331 = vmatprep.subr.mxu0 %v127
    %332 = vmatpush1.msra.mxu0 %v126
    %333 = vmatprep.subr.mxu0 %v133
    %334 = vmatpush1.msra.mxu0 %v132
    %335 = vmatprep.subr.mxu0 %v139
    %336 = vmatpush1.msra.mxu0 %v138
    %337 = vmatprep.subr.mxu0 %v145
    %338 = vmatpush1.msra.mxu0 %v144
    %339 = vmatprep.subr.mxu0 %v151
    %340 = vmatpush1.msra.mxu0 %v150
    %341 = vmatprep.subr.mxu0 %v157
    %342 = vmatpush1.msra.mxu0 %v156
    %343 = vmatprep.subr.mxu0 %v163
    %344 = vmatpush1.msra.mxu0 %v162
    %345 = vmatprep.subr.mxu0 %v169
    %346 = vmatpush1.msra.mxu0 %v168
    %347 = vmatprep.subr.mxu0 %v175
    %348 = vmatpush1.msra.mxu0 %v174
    %349 = vmatprep.subr.mxu0 %v181
    %350 = vmatpush1.msra.mxu0 %v180
    %351 = vmatprep.subr.mxu0 %v187
    %352 = vmatpush1.msra.mxu0 %v186
    %353 = vmatprep.subr.mxu0 %v193
    %354 = vmatpush1.msra.mxu0 %v192
    %355 = vmatprep.subr.mxu0 %v199
    %356 = vmatpush1.msra.mxu0 %v198
    %357 = vmatprep.subr.mxu0 %v205
    %358 = vmatpush1.msra.mxu0 %v204
    %359 = vmatprep.subr.mxu0 %v211
    %360 = vmatpush1.msra.mxu0 %v210
    %361 = vmatprep.subr.mxu0 %v217
    %362 = vmatpush1.msra.mxu0 %v216
    %363 = vmatprep.subr.mxu0 %v223
    %364 = vmatpush1.msra.mxu0 %v222
    %365 = vmatprep.subr.mxu0 %v229
    %366 = vmatpush1.msra.mxu0 %v228
    %367 = vmatprep.mubr.f32.mxu0 %v39
    %368 = vmatmul.mubr.f32.gmra.mrb[0].mxu0 %v38
    %v369 = vpop.f32.mrb[0].mxu0
    %v370 = vadd.f32 0.0, %v369
    %v371 = vpop.f32.mrb[0].mxu0
    %v372 = vadd.f32 0.0, %v371
    %373 = vdwg.mxu0
    %374 = vmatprep.subr.mxu0 %v45
    %375 = vmatpush1.msra.mxu0 %v44
    %376 = vmatprep.subr.mxu0 %v51
    %377 = vmatpush1.msra.mxu0 %v50
    %378 = vmatprep.subr.mxu0 %v57
    %379 = vmatpush1.msra.mxu0 %v56
    %380 = vmatprep.subr.mxu0 %v63
    %381 = vmatpush1.msra.mxu0 %v62
    %382 = vmatprep.subr.mxu0 %v69
    %383 = vmatpush1.msra.mxu0 %v68
    %384 = vmatprep.subr.mxu0 %v75
    %385 = vmatpush1.msra.mxu0 %v74
    %386 = vmatprep.subr.mxu0 %v81
    %387 = vmatpush1.msra.mxu0 %v80
    %388 = vmatprep.subr.mxu0 %v87
    %389 = vmatpush1.msra.mxu0 %v86
    %390 = vmatprep.subr.mxu0 %v93
    %391 = vmatpush1.msra.mxu0 %v92
    %392 = vmatprep.subr.mxu0 %v99
    %393 = vmatpush1.msra.mxu0 %v98
    %394 = vmatprep.subr.mxu0 %v105
    %395 = vmatpush1.msra.mxu0 %v104
    %396 = vmatprep.subr.mxu0 %v111
    %397 = vmatpush1.msra.mxu0 %v110
    %398 = vmatprep.subr.mxu0 %v117
    %399 = vmatpush1.msra.mxu0 %v116
    %400 = vmatprep.subr.mxu0 %v123
    %401 = vmatpush1.msra.mxu0 %v122
    %402 = vmatprep.subr.mxu0 %v129
    %403 = vmatpush1.msra.mxu0 %v128
    %404 = vmatprep.subr.mxu0 %v135
    %405 = vmatpush1.msra.mxu0 %v134
    %406 = vmatprep.subr.mxu0 %v141
    %407 = vmatpush1.msra.mxu0 %v140
    %408 = vmatprep.subr.mxu0 %v147
    %409 = vmatpush1.msra.mxu0 %v146
    %410 = vmatprep.subr.mxu0 %v153
    %411 = vmatpush1.msra.mxu0 %v152
    %412 = vmatprep.subr.mxu0 %v159
    %413 = vmatpush1.msra.mxu0 %v158
    %414 = vmatprep.subr.mxu0 %v165
    %415 = vmatpush1.msra.mxu0 %v164
    %416 = vmatprep.subr.mxu0 %v171
    %417 = vmatpush1.msra.mxu0 %v170
    %418 = vmatprep.subr.mxu0 %v177
    %419 = vmatpush1.msra.mxu0 %v176
    %420 = vmatprep.subr.mxu0 %v183
    %421 = vmatpush1.msra.mxu0 %v182
    %422 = vmatprep.subr.mxu0 %v189
    %423 = vmatpush1.msra.mxu0 %v188
    %424 = vmatprep.subr.mxu0 %v195
    %425 = vmatpush1.msra.mxu0 %v194
    %426 = vmatprep.subr.mxu0 %v201
    %427 = vmatpush1.msra.mxu0 %v200
    %428 = vmatprep.subr.mxu0 %v207
    %429 = vmatpush1.msra.mxu0 %v206
    %430 = vmatprep.subr.mxu0 %v213
    %431 = vmatpush1.msra.mxu0 %v212
    %432 = vmatprep.subr.mxu0 %v219
    %433 = vmatpush1.msra.mxu0 %v218
    %434 = vmatprep.subr.mxu0 %v225
    %435 = vmatpush1.msra.mxu0 %v224
    %436 = vmatprep.subr.mxu0 %v231
    %437 = vmatpush1.msra.mxu0 %v230
    %438 = vmatprep.mubr.f32.mxu0 %v39
    %439 = vmatmul.mubr.f32.gmra.mrb[0].mxu0 %v38
    %v440 = vpop.f32.mrb[0].mxu0
    %v441 = vadd.f32 0.0, %v440
    %v442 = vpop.f32.mrb[0].mxu0
    %v443 = vadd.f32 0.0, %v442
    %444 = vdwg.mxu0
    %v445 = vmax.f32 %v299, %v301
    %447 = vrot.lane.b32.xlu0 %v445, 64
    %v448 = vpop.permute.xlu0 %447
    %v450 = vmax.f32 %v445, %v448
    %452 = vrot.lane.b32.xlu0 %v450, 96
    %v453 = vpop.permute.xlu0 %452
    %v455 = vmax.f32 %v450, %v453
    %457 = vrot.lane.b32.xlu0 %v455, 112
    %v458 = vpop.permute.xlu0 %457
    %v460 = vmax.f32 %v455, %v458
    %v461 = vmax.f32 %v370, %v372
    %463 = vrot.lane.b32.xlu0 %v461, 64
    %v464 = vpop.permute.xlu0 %463
    %v466 = vmax.f32 %v461, %v464
    %468 = vrot.lane.b32.xlu0 %v466, 96
    %v469 = vpop.permute.xlu0 %468
    %v471 = vmax.f32 %v466, %v469
    %473 = vrot.lane.b32.xlu0 %v471, 112
    %v474 = vpop.permute.xlu0 %473
    %v476 = vmax.f32 %v471, %v474
    %478 = vrot.lane.b32.xlu0 %v476, 120
    %v479 = vpop.permute.xlu0 %478
    %v481 = vmax.f32 %v476, %v479
    %483 = vrot.lane.b32.xlu0 %v481, 124
    %v484 = vpop.permute.xlu0 %483
    %v486 = vmax.f32 %v481, %v484
    %v487 = vmax.f32 %v441, %v443
    %489 = vrot.lane.b32.xlu0 %v487, 64
    %v490 = vpop.permute.xlu0 %489
    %v492 = vmax.f32 %v487, %v490
    %494 = vrot.lane.b32.xlu0 %v492, 96
    %v495 = vpop.permute.xlu0 %494
    %v497 = vmax.f32 %v492, %v495
    %499 = vrot.lane.b32.xlu0 %v497, 112
    %v500 = vpop.permute.xlu0 %499
    %v502 = vmax.f32 %v497, %v500
    %504 = vrot.lane.b32.xlu0 %v502, 120
    %v505 = vpop.permute.xlu0 %504
    %v507 = vmax.f32 %v502, %v505
    %509 = vrot.lane.b32.xlu0 %v507, 124
    %v510 = vpop.permute.xlu0 %509
    %v512 = vmax.f32 %v507, %v510
    %514 = vrot.lane.b32.xlu0 %v512, 126
    %v515 = vpop.permute.xlu0 %514
    %v517 = vmax.f32 %v512, %v515
    %519 = vrot.lane.b32.xlu0 %v517, 127
    %v520 = vpop.permute.xlu0 %519
    %v522 = vmax.f32 %v517, %v520
    %p523 = scmp.eq.s32.totalorder 0, 0
    // Predicated region
    $region18: #{tpu_custom_call.1} parent=1 // pred_check
      %p524 = pneg %p523
    $region19: #{tpu_custom_call.1} parent=1 // pred_check_branch
      %526 = sbr.rel (%p524) target = $region21
    $region20: #{tpu_custom_call.1} parent=1 // pred_region
      %527 = vst [vmem:[#allocation2] sm:$0xff] -inf
      %528 = vst [vmem:[#allocation2 + $0x8] sm:$0xff] -inf
      %529 = vst [vmem:[#allocation2 + $0x10] sm:$0xff] -inf
    $region21: #{tpu_custom_call.1} parent=1 // pred_fallthru
      _
    %v530 = vld [vmem:[#allocation2] sm:$0xff]
    %v531 = vmax.f32 %v530, %v460
    %vm532 = vcmask 130048
    %533 = vst.msk [vmem:[#allocation2] sm:$0xff] %vm532, %v531
    %v534 = vld [vmem:[#allocation2 + $0x8] sm:$0xff]
    %v535 = vmax.f32 %v534, %v486
    %vm536 = vcmask 31744
    %537 = vst.msk [vmem:[#allocation2 + $0x8] sm:$0xff] %vm536, %v535
    %v538 = vld [vmem:[#allocation2 + $0x10] sm:$0xff]
    %v539 = vmax.f32 %v538, %v522
    %vm540 = vcmask 7168
    %541 = vst.msk [vmem:[#allocation2 + $0x10] sm:$0xff] %vm540, %v539
    // Predicated region
    $region22: #{tpu_custom_call.1} parent=1 // pred_check
      %p542 = pneg %p523
    $region23: #{tpu_custom_call.1} parent=1 // pred_check_branch
      %544 = sbr.rel (%p542) target = $region25
    $region24: #{tpu_custom_call.1} parent=1 // pred_region
      %v545 = vld [vmem:[#allocation2] sm:$0xff]
      %546 = vst [vmem:[#allocation8] sm:$0xff] %v545
      %v547 = vld [vmem:[#allocation2 + $0x8] sm:$0xff]
      %548 = vst [vmem:[#allocation8 + $0x8] sm:$0xff] %v547
      %v549 = vld [vmem:[#allocation2 + $0x10] sm:$0xff]
      %550 = vst [vmem:[#allocation8 + $0x10] sm:$0xff] %v549
    $region25: #{tpu_custom_call.1} parent=1 // pred_fallthru
      _
    // Predicated region
    $region26: #{tpu_custom_call.1} parent=1 // pred_check
      _
    $region27: #{tpu_custom_call.1} parent=1 // pred_check_branch
      %552 = sbr.rel (0) target = $region29
    $region28: #{tpu_custom_call.1} parent=1 // pred_region
      %s554 = ssub.s32 384, 384
      %555 = vsyncadd [#allocation5], %s554
      %s557 = sshll.u32 [#allocation8], 4
      %s558 = int_to_ptr.vmem [resolvable:$true] %s557
      %560 = dma.vmem_to_hbm [thread:$0]  %s558, 384, %s2, [#allocation5]
    $region29: #{tpu_custom_call.1} parent=1 // pred_fallthru
      _
    // Predicated region
    $region30: #{tpu_custom_call.1} parent=1 // pred_check
      _
    $region31: #{tpu_custom_call.1} parent=1 // pred_check_branch
      %562 = sbr.rel (0) target = $region33
    $region32: #{tpu_custom_call.1} parent=1 // pred_region
      %563 = dma.done [#allocation5], 384
    $region33: #{tpu_custom_call.1} parent=1 // pred_fallthru
      _
    %564 = vsyncpa [#allocation4], 1
    %565 = vsyncpa [#allocation7], 1
    %566 = vsyncpa [#allocation5], 1

</llo_original>
